<compile_context>
chip_gen: v6e
topology: v6e:2x2x1
jax: 0.10.0
libtpu: 0.0.40
codegen_flags: <defaults>
</compile_context>

<pallas_src>
import functools

import jax
import jax.numpy as jnp
from jax.experimental import pallas as pl
from jax.experimental.pallas import tpu as pltpu


LANE = 128          # pad hidden/output feature dims to a multiple of the lane width
SUBLANE = 16        # batch granularity: safe for bf16 (16,128) packing and f32 (8,128)
B_TILE_MAX = 1024   # rows per grid step (keep <= ~1024-2048 so v5e default VMEM is fine)


def _round_up(x, m):
    return (x + m - 1) // m * m


def _cdiv(a, b):
    return (a + b - 1) // b


def _fused_mlp_kernel(*refs, n_layers, compute_dtype):
    """Fused (Linear -> ReLU)*(L-1) -> Linear on one (b_tile, D0) block.

    refs = (x_ref, w0_ref, b0_ref, ..., w{L-1}_ref, b{L-1}_ref, o_ref)
    Hidden/output feature dims are pre-padded to 128 lanes (lane-dense MXU
    matmuls, unmasked full-width stores); the input feature dim is native.
    Matmuls run in `compute_dtype` (bf16) with f32 accumulation; the bias add
    and ReLU epilogue stay f32 (v5e has no bf16 VALU).  Intermediate
    activations never round-trip through HBM.
    """
    x_ref, o_ref = refs[0], refs[-1]
    wb = refs[1:-1]
    h = x_ref[...]                              # (b_tile, in_dim) compute_dtype
    for i in range(n_layers):                   # static unroll at trace time
        w = wb[2 * i][...]                      # (in, out_pad), pre-transposed
        b = wb[2 * i + 1][...]                  # (1, out_pad), f32
        h = jnp.dot(h, w, preferred_element_type=jnp.float32) + b   # f32 accum + epilogue
        if i != n_layers - 1:
            h = jnp.maximum(h, 0.0).astype(compute_dtype)           # narrow for next matmul
    o_ref[...] = h.astype(o_ref.dtype)


def init_simple_mlp_params(key, size_list):
    """PyTorch nn.Linear-style init: W (out, in), b (out,), U(-1/sqrt(fan_in), +)."""
    params = []
    for i in range(len(size_list) - 1):
        fan_in, fan_out = size_list[i], size_list[i + 1]
        key, kw, kb = jax.random.split(key, 3)
        bound = 1.0 / (fan_in ** 0.5)
        w = jax.random.uniform(kw, (fan_out, fan_in), jnp.float32, -bound, bound)
        b = jax.random.uniform(kb, (fan_out,), jnp.float32, -bound, bound)
        params.append((w, b))
    return params


def pack_params_for_pallas(params, size_list, compute_dtype=jnp.bfloat16):
    """One-time (hoisted) layout prep.

    W is transposed to (in, out) and zero-padded:
      * layer 0's in-dim stays at its native width (x is streamed unpadded),
      * every other in/out feature dim is padded to a 128-lane multiple.
    Weights are cast to `compute_dtype` (bf16) for native MXU rate + halved DMA
    bytes; biases stay f32 (added to the f32 accumulator).  Zero padding is
    exact through matmul, bias-add and ReLU.
    """
    packed = []
    for i, (w, b) in enumerate(params):
        in_d, out_d = size_list[i], size_list[i + 1]
        in_p = in_d if i == 0 else _round_up(in_d, LANE)
        out_p = _round_up(out_d, LANE)
        w_t = jnp.transpose(w).astype(jnp.float32)                   # (in, out)
        w_p = jnp.pad(w_t, ((0, in_p - in_d), (0, out_p - out_d)))
        w_p = w_p.astype(compute_dtype)
        b_p = jnp.pad(b.astype(jnp.float32), (0, out_p - out_d)).reshape(1, out_p)
        packed.append((w_p, b_p))
    return packed


def simple_mlp_forward(packed_params, x, size_list, *,
                       compute_dtype=jnp.bfloat16, slice_output=True):
    """Pallas implementation of Simple_MLP.forward: one fused pallas_call for
    the whole network, tiled over the batch dimension only."""
    in_dim, out_dim = size_list[0], size_list[-1]
    out_p = _round_up(out_dim, LANE)

    # glue: x.view(-1, size_list[0]); stream x at its NATIVE feature width
    # (no wrapper-side lane pad -> no extra HBM pass over x).
    x = x.reshape(-1, in_dim).astype(compute_dtype)
    B = x.shape[0]

    # Batch tiling:
    #   * tiles up to B_TILE_MAX rows for good BlockSpec pipelining,
    #   * at least 2 tiles when the batch is large enough, so the "parallel"
    #     grid axis can shard across both v7x TensorCores,
    #   * tile size derived from the tile count -> at most SUBLANE-1 extra
    #     zero rows per tile (no round-up-to-tile-max waste).
    B_sub = _round_up(B, SUBLANE)
    n_tiles = _cdiv(B_sub, B_TILE_MAX)
    if n_tiles == 1 and B_sub >= 2 * SUBLANE:
        n_tiles = 2                              # v7x megacore: use both TCs
    b_tile = _round_up(_cdiv(B_sub, n_tiles), SUBLANE)
    B_pad = n_tiles * b_tile
    if B_pad != B:
        x = jnp.pad(x, ((0, B_pad - B), (0, 0)))

    n_layers = len(packed_params)
    flat_wb = []
    # x block: last dim == full array dim (64) is legal and skips lane padding.
    # (pipeline_mode=pl.Buffered(3) on this spec is a possible v5e sweep; the
    #  default double-buffering is enough at >=1024-row tiles.)
    in_specs = [pl.BlockSpec((b_tile, in_dim), lambda i: (i, 0))]
    for w_p, b_p in packed_params:
        flat_wb.extend([w_p, b_p])
        in_specs.append(pl.BlockSpec(w_p.shape, lambda i: (0, 0)))   # weights resident
        in_specs.append(pl.BlockSpec(b_p.shape, lambda i: (0, 0)))   # bias resident

    out = pl.pallas_call(
        functools.partial(_fused_mlp_kernel, n_layers=n_layers,
                          compute_dtype=compute_dtype),
        out_shape=jax.ShapeDtypeStruct((B_pad, out_p), compute_dtype),
        grid=(n_tiles,),
        in_specs=in_specs,
        out_specs=pl.BlockSpec((b_tile, out_p), lambda i: (i, 0)),
        compiler_params=pltpu.CompilerParams(
            dimension_semantics=("parallel",),   # shard batch tiles across TCs
        ),
    )(x, *flat_wb)

    if slice_output:
        # Consumers that can take the padded (B_pad, 128) buffer should pass
        # slice_output=False and avoid this extra HBM pass.
        out = out[:B, :out_dim]
    return out


def simple_mlp_reference(params, x, size_list):
    """Plain-JAX f32 reference for correctness check (PyTorch-layout params)."""
    x = x.reshape(-1, size_list[0]).astype(jnp.float32)
    n_layers = len(params)
    for i, (w, b) in enumerate(params):
        x = x @ w.T + b
        if i != n_layers - 1:
            x = jnp.maximum(x, 0.0)
    return x


if __name__ == "__main__":
    size_list = [64, 32, 32, 10]  # Simple_MLP([64, 32, 32, 10])

    key = jax.random.PRNGKey(0)
    key, kx = jax.random.split(key)
    # Trailing dims multiply to size_list[0]=64; view(-1, 64) -> (2, 64)
    x = jax.random.normal(kx, (2, 4, 16), jnp.float32)

    params = init_simple_mlp_params(key, size_list)
    packed = pack_params_for_pallas(params, size_list)   # hoisted: once, not per call

    fwd = jax.jit(functools.partial(simple_mlp_forward, size_list=size_list))
    out = jax.block_until_ready(fwd(packed, x))

    ref = simple_mlp_reference(params, x, size_list)
    assert out.shape == (2, size_list[-1]), out.shape
    # bf16 streaming with f32 accumulation -> ~1e-2 tolerance vs f32 reference.
    assert jnp.allclose(out.astype(jnp.float32), ref, atol=3e-2, rtol=3e-2), \
        "mismatch vs reference"

    print("KERNEL_OK")
</pallas_src>

<mosaic_0001>
module attributes {stable_mosaic.version = 11 : i64} {
  func.func @_fused_mlp_kernel(%arg0: i32, %arg1: memref<16x64xbf16, #tpu.memory_space<vmem>>, %arg2: memref<64x128xbf16, #tpu.memory_space<vmem>>, %arg3: memref<1x128xf32, #tpu.memory_space<vmem>>, %arg4: memref<128x128xbf16, #tpu.memory_space<vmem>>, %arg5: memref<1x128xf32, #tpu.memory_space<vmem>>, %arg6: memref<128x128xbf16, #tpu.memory_space<vmem>>, %arg7: memref<1x128xf32, #tpu.memory_space<vmem>>, %arg8: memref<16x128xbf16, #tpu.memory_space<vmem>>) attributes {dimension_semantics = [#tpu.dimension_semantics<parallel>], iteration_bounds = array<i64: 1>, scalar_prefetch = 0 : i64, scratch_operands = 0 : i64, tpu.core_type = #tpu.core_type<tc>, window_params = [{transform_indices = @transform_0, window_bounds = array<i64: 16, 64>}, {pipeline_mode = #tpu.pipeline_mode<synchronous>, transform_indices = @transform_1, window_bounds = array<i64: 64, 128>}, {pipeline_mode = #tpu.pipeline_mode<synchronous>, transform_indices = @transform_2, window_bounds = array<i64: 1, 128>}, {pipeline_mode = #tpu.pipeline_mode<synchronous>, transform_indices = @transform_3, window_bounds = array<i64: 128, 128>}, {pipeline_mode = #tpu.pipeline_mode<synchronous>, transform_indices = @transform_4, window_bounds = array<i64: 1, 128>}, {pipeline_mode = #tpu.pipeline_mode<synchronous>, transform_indices = @transform_5, window_bounds = array<i64: 128, 128>}, {pipeline_mode = #tpu.pipeline_mode<synchronous>, transform_indices = @transform_6, window_bounds = array<i64: 1, 128>}, {transform_indices = @transform_7, window_bounds = array<i64: 16, 128>}]} {
    %c0 = arith.constant 0 : index
    %c0_0 = arith.constant 0 : index
    %0 = vector.load %arg1[%c0, %c0_0] : memref<16x64xbf16, #tpu.memory_space<vmem>>, vector<16x64xbf16>
    %c0_1 = arith.constant 0 : index
    %c0_2 = arith.constant 0 : index
    %1 = vector.load %arg2[%c0_1, %c0_2] : memref<64x128xbf16, #tpu.memory_space<vmem>>, vector<64x128xbf16>
    %c0_3 = arith.constant 0 : index
    %c0_4 = arith.constant 0 : index
    %2 = vector.load %arg3[%c0_3, %c0_4] : memref<1x128xf32, #tpu.memory_space<vmem>>, vector<1x128xf32>
    %cst = arith.constant dense<0.000000e+00> : vector<16x128xf32>
    %3 = tpu.matmul %0, %1, %cst {dimension_numbers = #tpu.dot_dimension_numbers<[1], [0], [0], [1], [0, 0, 1, 1], [], []>} : vector<16x64xbf16>, vector<64x128xbf16>, vector<16x128xf32> -> vector<16x128xf32>
    %4 = vector.broadcast %2 : vector<1x128xf32> to vector<16x128xf32>
    %5 = arith.addf %3, %4 : vector<16x128xf32>
    %cst_5 = arith.constant 0.000000e+00 : f32
    %6 = vector.broadcast %cst_5 : f32 to vector<16x128xf32>
    %7 = arith.maximumf %5, %6 : vector<16x128xf32>
    %8 = arith.truncf %7 : vector<16x128xf32> to vector<16x128xbf16>
    %c0_6 = arith.constant 0 : index
    %c0_7 = arith.constant 0 : index
    %9 = vector.load %arg4[%c0_6, %c0_7] : memref<128x128xbf16, #tpu.memory_space<vmem>>, vector<128x128xbf16>
    %c0_8 = arith.constant 0 : index
    %c0_9 = arith.constant 0 : index
    %10 = vector.load %arg5[%c0_8, %c0_9] : memref<1x128xf32, #tpu.memory_space<vmem>>, vector<1x128xf32>
    %cst_10 = arith.constant dense<0.000000e+00> : vector<16x128xf32>
    %11 = tpu.matmul %8, %9, %cst_10 {dimension_numbers = #tpu.dot_dimension_numbers<[1], [0], [0], [1], [0, 0, 1, 1], [], []>} : vector<16x128xbf16>, vector<128x128xbf16>, vector<16x128xf32> -> vector<16x128xf32>
    %12 = vector.broadcast %10 : vector<1x128xf32> to vector<16x128xf32>
    %13 = arith.addf %11, %12 : vector<16x128xf32>
    %cst_11 = arith.constant 0.000000e+00 : f32
    %14 = vector.broadcast %cst_11 : f32 to vector<16x128xf32>
    %15 = arith.maximumf %13, %14 : vector<16x128xf32>
    %16 = arith.truncf %15 : vector<16x128xf32> to vector<16x128xbf16>
    %c0_12 = arith.constant 0 : index
    %c0_13 = arith.constant 0 : index
    %17 = vector.load %arg6[%c0_12, %c0_13] : memref<128x128xbf16, #tpu.memory_space<vmem>>, vector<128x128xbf16>
    %c0_14 = arith.constant 0 : index
    %c0_15 = arith.constant 0 : index
    %18 = vector.load %arg7[%c0_14, %c0_15] : memref<1x128xf32, #tpu.memory_space<vmem>>, vector<1x128xf32>
    %cst_16 = arith.constant dense<0.000000e+00> : vector<16x128xf32>
    %19 = tpu.matmul %16, %17, %cst_16 {dimension_numbers = #tpu.dot_dimension_numbers<[1], [0], [0], [1], [0, 0, 1, 1], [], []>} : vector<16x128xbf16>, vector<128x128xbf16>, vector<16x128xf32> -> vector<16x128xf32>
    %20 = vector.broadcast %18 : vector<1x128xf32> to vector<16x128xf32>
    %21 = arith.addf %19, %20 : vector<16x128xf32>
    %22 = arith.truncf %21 : vector<16x128xf32> to vector<16x128xbf16>
    %c0_17 = arith.constant 0 : index
    %c0_18 = arith.constant 0 : index
    %23 = vector.load %arg8[%c0_17, %c0_18] : memref<16x128xbf16, #tpu.memory_space<vmem>>, vector<16x128xbf16>
    tpu.vector_store %arg8[%c0_17, %c0_18], %22 {strides = array<i32>} : memref<16x128xbf16, #tpu.memory_space<vmem>>, vector<16x128xbf16>,
    return
  }
  func.func @transform_0(%arg0: i32) -> (i32, i32) {
    %c0_i32 = arith.constant 0 : i32
    %c0_i32_0 = arith.constant 0 : i32
    return %arg0, %c0_i32 : i32, i32
  }
  func.func @transform_1(%arg0: i32) -> (i32, i32) {
    %c0_i32 = arith.constant 0 : i32
    %c0_i32_0 = arith.constant 0 : i32
    %c0_i32_1 = arith.constant 0 : i32
    return %c0_i32, %c0_i32_0 : i32, i32
  }
  func.func @transform_2(%arg0: i32) -> (i32, i32) {
    %c0_i32 = arith.constant 0 : i32
    %c0_i32_0 = arith.constant 0 : i32
    %c0_i32_1 = arith.constant 0 : i32
    return %c0_i32, %c0_i32_0 : i32, i32
  }
  func.func @transform_3(%arg0: i32) -> (i32, i32) {
    %c0_i32 = arith.constant 0 : i32
    %c0_i32_0 = arith.constant 0 : i32
    %c0_i32_1 = arith.constant 0 : i32
    return %c0_i32, %c0_i32_0 : i32, i32
  }
  func.func @transform_4(%arg0: i32) -> (i32, i32) {
    %c0_i32 = arith.constant 0 : i32
    %c0_i32_0 = arith.constant 0 : i32
    %c0_i32_1 = arith.constant 0 : i32
    return %c0_i32, %c0_i32_0 : i32, i32
  }
  func.func @transform_5(%arg0: i32) -> (i32, i32) {
    %c0_i32 = arith.constant 0 : i32
    %c0_i32_0 = arith.constant 0 : i32
    %c0_i32_1 = arith.constant 0 : i32
    return %c0_i32, %c0_i32_0 : i32, i32
  }
  func.func @transform_6(%arg0: i32) -> (i32, i32) {
    %c0_i32 = arith.constant 0 : i32
    %c0_i32_0 = arith.constant 0 : i32
    %c0_i32_1 = arith.constant 0 : i32
    return %c0_i32, %c0_i32_0 : i32, i32
  }
  func.func @transform_7(%arg0: i32) -> (i32, i32) {
    %c0_i32 = arith.constant 0 : i32
    %c0_i32_0 = arith.constant 0 : i32
    return %arg0, %c0_i32 : i32, i32
  }
}

</mosaic_0001>

<llo_original>
// kernel: simple_mlp_forward.1
$region0: #{simple_mlp_forward.1}
  #allocation0 [shape = 'u32[]', space=smem, size = 0x4, offset = 0x4, fixed_abs, tag = 'smem constant byte address 0x4 - core index']
  #allocation1 [shape = 'u32[144,128]{1,0:T(1,128)}', space=vmem, size = 0x12000, scoped, tag = 'internal scratch']
  %s0 = inlined_call_operand.vmem [shape: bf16[16,64], index: 0, kind: input, shape index: {}]
  %s1 = inlined_call_operand.hbm [shape: bf16[64,128], index: 1, kind: input, shape index: {}]
  %s2 = inlined_call_operand.vmem [shape: f32[1,128], index: 2, kind: input, shape index: {}]
  %s3 = inlined_call_operand.hbm [shape: bf16[128,128], index: 3, kind: input, shape index: {}]
  %s4 = inlined_call_operand.vmem [shape: f32[1,128], index: 4, kind: input, shape index: {}]
  %s5 = inlined_call_operand.hbm [shape: bf16[128,128], index: 5, kind: input, shape index: {}]
  %s6 = inlined_call_operand.vmem [shape: f32[1,128], index: 6, kind: input, shape index: {}]
  %s7 = inlined_call_operand.vmem [shape: bf16[16,128], index: 7, kind: output, shape index: {}]
  %s8 = sld [smem:[#allocation0]]
  $region50: #{simple_mlp_forward.1} parent=0
    _
  %s10 = ssub.s32 1, %s8
  %s11 = scalar_select 0, %s10, %s8
  $region1: #{simple_mlp_forward.1} parent=0
    #allocation2 [shape = 'u8[16384]{0}', space=vmem, size = 0x4000, scoped, tag = 'input window, operand 1, single buffered']
    #allocation3 [shape = 's32[1]{0}', space=sflag, size = 0x4, scoped, tag = 'scoped memory for simple_mlp_forward.1']
    #allocation4 [shape = 'u8[32768]{0}', space=vmem, size = 0x8000, scoped, tag = 'input window, operand 3, single buffered']
    #allocation5 [shape = 's32[1]{0}', space=sflag, size = 0x4, scoped, tag = 'scoped memory for simple_mlp_forward.1']
    #allocation6 [shape = 'u8[32768]{0}', space=vmem, size = 0x8000, scoped, tag = 'input window, operand 5, single buffered']
    %12 = vsyncpa [#allocation3], 0
    %13 = vsyncpa [#allocation5], 0
    // Predicated region
    $region2: #{simple_mlp_forward.1} parent=1 // pred_check
      _
    $region3: #{simple_mlp_forward.1} parent=1 // pred_check_branch
      %15 = sbr.rel (0) target = $region5
    $region4: #{simple_mlp_forward.1} parent=1 // pred_region
      _
    $region5: #{simple_mlp_forward.1} parent=1 // pred_fallthru
      _
    // Predicated region
    $region6: #{simple_mlp_forward.1} parent=1 // pred_check
      _
    $region7: #{simple_mlp_forward.1} parent=1 // pred_check_branch
      %17 = sbr.rel (0) target = $region9
    $region8: #{simple_mlp_forward.1} parent=1 // pred_region
      %s19 = ssub.s32 512, 512
      %20 = vsyncadd [#allocation3], %s19
      %s21 = sshll.u32 [#allocation2], 4
      %s22 = int_to_ptr.vmem [resolvable:$true] %s21
      %27 = dma.hbm_to_vmem [thread:$0]  %s1, 512, %s22, [#allocation3], 64, 64, 4
    $region9: #{simple_mlp_forward.1} parent=1 // pred_fallthru
      _
    // Predicated region
    $region10: #{simple_mlp_forward.1} parent=1 // pred_check
      _
    $region11: #{simple_mlp_forward.1} parent=1 // pred_check_branch
      %29 = sbr.rel (0) target = $region13
    $region12: #{simple_mlp_forward.1} parent=1 // pred_region
      _
    $region13: #{simple_mlp_forward.1} parent=1 // pred_fallthru
      _
    // Predicated region
    $region14: #{simple_mlp_forward.1} parent=1 // pred_check
      _
    $region15: #{simple_mlp_forward.1} parent=1 // pred_check_branch
      %31 = sbr.rel (0) target = $region17
    $region16: #{simple_mlp_forward.1} parent=1 // pred_region
      %s33 = ssub.s32 1024, 1024
      %34 = vsyncadd [#allocation5], %s33
      %s35 = sshll.u32 [#allocation4], 4
      %s36 = int_to_ptr.vmem [resolvable:$true] %s35
      %41 = dma.hbm_to_vmem [thread:$0]  %s3, 1024, %s36, [#allocation5], 64, 64, 4
    $region17: #{simple_mlp_forward.1} parent=1 // pred_fallthru
      _
    // Predicated region
    $region18: #{simple_mlp_forward.1} parent=1 // pred_check
      _
    $region19: #{simple_mlp_forward.1} parent=1 // pred_check_branch
      %43 = sbr.rel (0) target = $region21
    $region20: #{simple_mlp_forward.1} parent=1 // pred_region
      _
    $region21: #{simple_mlp_forward.1} parent=1 // pred_fallthru
      _
    // Predicated region
    $region22: #{simple_mlp_forward.1} parent=1 // pred_check
      _
    $region23: #{simple_mlp_forward.1} parent=1 // pred_check_branch
      %45 = sbr.rel (0) target = $region25
    $region24: #{simple_mlp_forward.1} parent=1 // pred_region
      %s47 = ssub.s32 1024, 1024
      %48 = vsyncadd [#allocation5], %s47
      %s49 = sshll.u32 [#allocation6], 4
      %s50 = int_to_ptr.vmem [resolvable:$true] %s49
      %55 = dma.hbm_to_vmem [thread:$0]  %s5, 1024, %s50, [#allocation5], 64, 64, 4
    $region25: #{simple_mlp_forward.1} parent=1 // pred_fallthru
      _
    // Predicated region
    $region26: #{simple_mlp_forward.1} parent=1 // pred_check
      _
    $region27: #{simple_mlp_forward.1} parent=1 // pred_check_branch
      %57 = sbr.rel (0) target = $region29
    $region28: #{simple_mlp_forward.1} parent=1 // pred_region
      _
    $region29: #{simple_mlp_forward.1} parent=1 // pred_fallthru
      _
    // Predicated region
    $region30: #{simple_mlp_forward.1} parent=1 // pred_check
      _
    $region31: #{simple_mlp_forward.1} parent=1 // pred_check_branch
      %59 = sbr.rel (0) target = $region33
    $region32: #{simple_mlp_forward.1} parent=1 // pred_region
      %60 = dma.done [#allocation3], 512
    $region33: #{simple_mlp_forward.1} parent=1 // pred_fallthru
      _
    // Predicated region
    $region34: #{simple_mlp_forward.1} parent=1 // pred_check
      _
    $region35: #{simple_mlp_forward.1} parent=1 // pred_check_branch
      %62 = sbr.rel (0) target = $region37
    $region36: #{simple_mlp_forward.1} parent=1 // pred_region
      %63 = dma.done [#allocation5], 1024
    $region37: #{simple_mlp_forward.1} parent=1 // pred_fallthru
      _
    // Predicated region
    $region38: #{simple_mlp_forward.1} parent=1 // pred_check
      _
    $region39: #{simple_mlp_forward.1} parent=1 // pred_check_branch
      %65 = sbr.rel (0) target = $region41
    $region40: #{simple_mlp_forward.1} parent=1 // pred_region
      %66 = dma.done [#allocation5], 1024
    $region41: #{simple_mlp_forward.1} parent=1 // pred_fallthru
      _
    %v68 = vld [vmem:[%s0] sm:$0xf]
    %v69 = vld [vmem:[%s0 + $0x4] sm:$0xf]
    %v70 = vld [vmem:[#allocation2] sm:$0xf]
    %v71 = vld [vmem:[#allocation2 + $0x4] sm:$0xf]
    %v72 = vld [vmem:[#allocation2 + $0x8] sm:$0xf]
    %v73 = vld [vmem:[#allocation2 + $0xc] sm:$0xf]
    %v74 = vld [vmem:[#allocation2 + $0x10] sm:$0xf]
    %v75 = vld [vmem:[#allocation2 + $0x14] sm:$0xf]
    %v76 = vld [vmem:[#allocation2 + $0x18] sm:$0xf]
    %v77 = vld [vmem:[#allocation2 + $0x1c] sm:$0xf]
    %v78 = vld [vmem:[%s2] sm:$0x1]
    %v80 = vlaneseq
    %v81 = vshrl.u32 %v80, 7
    %v82 = vsub.s32 0, %v81
    %v83 = vrot.slane %v78, %v82
    %v87 = vunpack.c.l.b16 %v68
    %v88 = vunpack.c.l.b16 %v69
    %v89 = vpack.c.b16 %v88, %v87
    %v98 = vunpack.c.l.b16 %v70
    %v99 = vunpack.c.l.b16 %v71
    %v100 = vunpack.c.l.b16 %v72
    %v101 = vunpack.c.l.b16 %v73
    %v102 = vunpack.c.l.b16 %v74
    %v103 = vunpack.c.l.b16 %v75
    %v104 = vunpack.c.l.b16 %v76
    %v105 = vunpack.c.l.b16 %v77
    %v106 = vpack.c.b16 %v99, %v98
    %v107 = vpack.c.b16 %v101, %v100
    %v108 = vpack.c.b16 %v103, %v102
    %v109 = vpack.c.b16 %v105, %v104
    %vm114 = vcmask 523264
    %v116 = vsel %vm114, %v89, 0
    %118 = vmatprep.subr.bf16.mxu0 0
    %119 = vmatpush1.bf16.msra.mxu0 0
    %120 = vmatprep.subr.bf16.mxu0 0
    %121 = vmatpush1.bf16.msra.mxu0 0
    %122 = vmatprep.subr.bf16.mxu0 0
    %123 = vmatpush1.bf16.msra.mxu0 0
    %124 = vmatprep.subr.bf16.mxu0 0
    %125 = vmatpush1.bf16.msra.mxu0 0
    %126 = vmatprep.subr.bf16.mxu0 0
    %127 = vmatpush1.bf16.msra.mxu0 %v109
    %128 = vmatprep.subr.bf16.mxu0 0
    %129 = vmatpush1.bf16.msra.mxu0 %v108
    %130 = vmatprep.subr.bf16.mxu0 0
    %131 = vmatpush1.bf16.msra.mxu0 %v107
    %132 = vmatprep.subr.bf16.mxu0 0
    %133 = vmatpush1.bf16.msra.mxu0 %v106
    %134 = vmatprep.subr.bf16.mxu0 0
    %135 = vmatpush2.bf16.msra.mxu0 0
    %136 = vmatprep.subr.bf16.mxu0 0
    %137 = vmatpush2.bf16.msra.mxu0 0
    %138 = vmatprep.subr.bf16.mxu0 0
    %139 = vmatpush2.bf16.msra.mxu0 0
    %140 = vmatprep.subr.bf16.mxu0 0
    %141 = vmatpush2.bf16.msra.mxu0 0
    %142 = vmatprep.subr.bf16.mxu0 0
    %143 = vmatpush2.bf16.msra.mxu0 0
    %144 = vmatprep.subr.bf16.mxu0 0
    %145 = vmatpush2.bf16.msra.mxu0 0
    %146 = vmatprep.subr.bf16.mxu0 0
    %147 = vmatpush2.bf16.msra.mxu0 0
    %148 = vmatprep.subr.bf16.mxu0 0
    %149 = vmatpush2.bf16.msra.mxu0 0
    %150 = vmatprep.mubr.bf16.mxu0 0
    %151 = vmatmul.mubr.bf16.gmra.mxu0 %v116
    %v152 = vpop.f32.mrf.mxu0
    %v153 = vadd.f32 %v83, %v152
    %v154 = vpop.f32.mrf.mxu0
    %v155 = vpop.f32.mrf.mxu0
    %v156 = vadd.f32 %v83, %v155
    %v157 = vpop.f32.mrf.mxu0
    %158 = vdwg.mxu0
    %v159 = vmax.f32 %v153, 0.0
    %v160 = vmax.f32 %v156, 0.0
    %v161 = vpack.c.bf16 %v160, %v159
    %v162 = vld [vmem:[#allocation4] sm:$0xf]
    %v163 = vld [vmem:[#allocation4 + $0x4] sm:$0xf]
    %v164 = vld [vmem:[#allocation4 + $0x8] sm:$0xf]
    %v165 = vld [vmem:[#allocation4 + $0xc] sm:$0xf]
    %v166 = vld [vmem:[#allocation4 + $0x10] sm:$0xf]
    %v167 = vld [vmem:[#allocation4 + $0x14] sm:$0xf]
    %v168 = vld [vmem:[#allocation4 + $0x18] sm:$0xf]
    %v169 = vld [vmem:[#allocation4 + $0x1c] sm:$0xf]
    %v170 = vld [vmem:[#allocation4 + $0x20] sm:$0xf]
    %v171 = vld [vmem:[#allocation4 + $0x24] sm:$0xf]
    %v172 = vld [vmem:[#allocation4 + $0x28] sm:$0xf]
    %v173 = vld [vmem:[#allocation4 + $0x2c] sm:$0xf]
    %v174 = vld [vmem:[#allocation4 + $0x30] sm:$0xf]
    %v175 = vld [vmem:[#allocation4 + $0x34] sm:$0xf]
    %v176 = vld [vmem:[#allocation4 + $0x38] sm:$0xf]
    %v177 = vld [vmem:[#allocation4 + $0x3c] sm:$0xf]
    %v178 = vld [vmem:[%s4] sm:$0x1]
    %v180 = vlaneseq
    %v181 = vshrl.u32 %v180, 7
    %v182 = vsub.s32 0, %v181
    %v183 = vrot.slane %v178, %v182
    %v201 = vunpack.c.l.b16 %v162
    %v202 = vunpack.c.l.b16 %v163
    %v203 = vunpack.c.l.b16 %v164
    %v204 = vunpack.c.l.b16 %v165
    %v205 = vunpack.c.l.b16 %v166
    %v206 = vunpack.c.l.b16 %v167
    %v207 = vunpack.c.l.b16 %v168
    %v208 = vunpack.c.l.b16 %v169
    %v209 = vunpack.c.l.b16 %v170
    %v210 = vunpack.c.l.b16 %v171
    %v211 = vunpack.c.l.b16 %v172
    %v212 = vunpack.c.l.b16 %v173
    %v213 = vunpack.c.l.b16 %v174
    %v214 = vunpack.c.l.b16 %v175
    %v215 = vunpack.c.l.b16 %v176
    %v216 = vunpack.c.l.b16 %v177
    %v217 = vpack.c.b16 %v202, %v201
    %v218 = vpack.c.b16 %v204, %v203
    %v219 = vpack.c.b16 %v206, %v205
    %v220 = vpack.c.b16 %v208, %v207
    %v221 = vpack.c.b16 %v210, %v209
    %v222 = vpack.c.b16 %v212, %v211
    %v223 = vpack.c.b16 %v214, %v213
    %v224 = vpack.c.b16 %v216, %v215
    %233 = vmatprep.subr.bf16.mxu0 0
    %234 = vmatpush1.bf16.msra.mxu0 %v224
    %235 = vmatprep.subr.bf16.mxu0 0
    %236 = vmatpush1.bf16.msra.mxu0 %v223
    %237 = vmatprep.subr.bf16.mxu0 0
    %238 = vmatpush1.bf16.msra.mxu0 %v222
    %239 = vmatprep.subr.bf16.mxu0 0
    %240 = vmatpush1.bf16.msra.mxu0 %v221
    %241 = vmatprep.subr.bf16.mxu0 0
    %242 = vmatpush1.bf16.msra.mxu0 %v220
    %243 = vmatprep.subr.bf16.mxu0 0
    %244 = vmatpush1.bf16.msra.mxu0 %v219
    %245 = vmatprep.subr.bf16.mxu0 0
    %246 = vmatpush1.bf16.msra.mxu0 %v218
    %247 = vmatprep.subr.bf16.mxu0 0
    %248 = vmatpush1.bf16.msra.mxu0 %v217
    %249 = vmatprep.subr.bf16.mxu0 0
    %250 = vmatpush2.bf16.msra.mxu0 0
    %251 = vmatprep.subr.bf16.mxu0 0
    %252 = vmatpush2.bf16.msra.mxu0 0
    %253 = vmatprep.subr.bf16.mxu0 0
    %254 = vmatpush2.bf16.msra.mxu0 0
    %255 = vmatprep.subr.bf16.mxu0 0
    %256 = vmatpush2.bf16.msra.mxu0 0
    %257 = vmatprep.subr.bf16.mxu0 0
    %258 = vmatpush2.bf16.msra.mxu0 0
    %259 = vmatprep.subr.bf16.mxu0 0
    %260 = vmatpush2.bf16.msra.mxu0 0
    %261 = vmatprep.subr.bf16.mxu0 0
    %262 = vmatpush2.bf16.msra.mxu0 0
    %263 = vmatprep.subr.bf16.mxu0 0
    %264 = vmatpush2.bf16.msra.mxu0 0
    %265 = vmatprep.mubr.bf16.mxu0 0
    %266 = vmatmul.mubr.bf16.gmra.mxu0 %v161
    %v267 = vpop.f32.mrf.mxu0
    %v268 = vadd.f32 %v183, %v267
    %v269 = vpop.f32.mrf.mxu0
    %v270 = vpop.f32.mrf.mxu0
    %v271 = vadd.f32 %v183, %v270
    %v272 = vpop.f32.mrf.mxu0
    %273 = vdwg.mxu0
    %v274 = vmax.f32 %v268, 0.0
    %v275 = vmax.f32 %v271, 0.0
    %v276 = vpack.c.bf16 %v275, %v274
    %v277 = vld [vmem:[#allocation6] sm:$0xf]
    %v278 = vld [vmem:[#allocation6 + $0x4] sm:$0xf]
    %v279 = vld [vmem:[#allocation6 + $0x8] sm:$0xf]
    %v280 = vld [vmem:[#allocation6 + $0xc] sm:$0xf]
    %v281 = vld [vmem:[#allocation6 + $0x10] sm:$0xf]
    %v282 = vld [vmem:[#allocation6 + $0x14] sm:$0xf]
    %v283 = vld [vmem:[#allocation6 + $0x18] sm:$0xf]
    %v284 = vld [vmem:[#allocation6 + $0x1c] sm:$0xf]
    %v285 = vld [vmem:[#allocation6 + $0x20] sm:$0xf]
    %v286 = vld [vmem:[#allocation6 + $0x24] sm:$0xf]
    %v287 = vld [vmem:[#allocation6 + $0x28] sm:$0xf]
    %v288 = vld [vmem:[#allocation6 + $0x2c] sm:$0xf]
    %v289 = vld [vmem:[#allocation6 + $0x30] sm:$0xf]
    %v290 = vld [vmem:[#allocation6 + $0x34] sm:$0xf]
    %v291 = vld [vmem:[#allocation6 + $0x38] sm:$0xf]
    %v292 = vld [vmem:[#allocation6 + $0x3c] sm:$0xf]
    %v293 = vld [vmem:[%s6] sm:$0x1]
    %v295 = vlaneseq
    %v296 = vshrl.u32 %v295, 7
    %v297 = vsub.s32 0, %v296
    %v298 = vrot.slane %v293, %v297
    %v316 = vunpack.c.l.b16 %v277
    %v317 = vunpack.c.l.b16 %v278
    %v318 = vunpack.c.l.b16 %v279
    %v319 = vunpack.c.l.b16 %v280
    %v320 = vunpack.c.l.b16 %v281
    %v321 = vunpack.c.l.b16 %v282
    %v322 = vunpack.c.l.b16 %v283
    %v323 = vunpack.c.l.b16 %v284
    %v324 = vunpack.c.l.b16 %v285
    %v325 = vunpack.c.l.b16 %v286
    %v326 = vunpack.c.l.b16 %v287
    %v327 = vunpack.c.l.b16 %v288
    %v328 = vunpack.c.l.b16 %v289
    %v329 = vunpack.c.l.b16 %v290
    %v330 = vunpack.c.l.b16 %v291
    %v331 = vunpack.c.l.b16 %v292
    %v332 = vpack.c.b16 %v317, %v316
    %v333 = vpack.c.b16 %v319, %v318
    %v334 = vpack.c.b16 %v321, %v320
    %v335 = vpack.c.b16 %v323, %v322
    %v336 = vpack.c.b16 %v325, %v324
    %v337 = vpack.c.b16 %v327, %v326
    %v338 = vpack.c.b16 %v329, %v328
    %v339 = vpack.c.b16 %v331, %v330
    %348 = vmatprep.subr.bf16.mxu0 0
    %349 = vmatpush1.bf16.msra.mxu0 %v339
    %350 = vmatprep.subr.bf16.mxu0 0
    %351 = vmatpush1.bf16.msra.mxu0 %v338
    %352 = vmatprep.subr.bf16.mxu0 0
    %353 = vmatpush1.bf16.msra.mxu0 %v337
    %354 = vmatprep.subr.bf16.mxu0 0
    %355 = vmatpush1.bf16.msra.mxu0 %v336
    %356 = vmatprep.subr.bf16.mxu0 0
    %357 = vmatpush1.bf16.msra.mxu0 %v335
    %358 = vmatprep.subr.bf16.mxu0 0
    %359 = vmatpush1.bf16.msra.mxu0 %v334
    %360 = vmatprep.subr.bf16.mxu0 0
    %361 = vmatpush1.bf16.msra.mxu0 %v333
    %362 = vmatprep.subr.bf16.mxu0 0
    %363 = vmatpush1.bf16.msra.mxu0 %v332
    %364 = vmatprep.subr.bf16.mxu0 0
    %365 = vmatpush2.bf16.msra.mxu0 0
    %366 = vmatprep.subr.bf16.mxu0 0
    %367 = vmatpush2.bf16.msra.mxu0 0
    %368 = vmatprep.subr.bf16.mxu0 0
    %369 = vmatpush2.bf16.msra.mxu0 0
    %370 = vmatprep.subr.bf16.mxu0 0
    %371 = vmatpush2.bf16.msra.mxu0 0
    %372 = vmatprep.subr.bf16.mxu0 0
    %373 = vmatpush2.bf16.msra.mxu0 0
    %374 = vmatprep.subr.bf16.mxu0 0
    %375 = vmatpush2.bf16.msra.mxu0 0
    %376 = vmatprep.subr.bf16.mxu0 0
    %377 = vmatpush2.bf16.msra.mxu0 0
    %378 = vmatprep.subr.bf16.mxu0 0
    %379 = vmatpush2.bf16.msra.mxu0 0
    %380 = vmatprep.mubr.bf16.mxu0 0
    %381 = vmatmul.mubr.bf16.gmra.mxu0 %v276
    %v382 = vpop.f32.mrf.mxu0
    %v383 = vadd.f32 %v298, %v382
    %v384 = vpop.f32.mrf.mxu0
    %v385 = vpop.f32.mrf.mxu0
    %v386 = vadd.f32 %v298, %v385
    %v387 = vpop.f32.mrf.mxu0
    %388 = vdwg.mxu0
    %v389 = vpack.c.bf16 %v386, %v383
    %v391 = vunpack.c.l.b16 %v389
    %v392 = vunpack.c.h.b16 %v389
    %v393 = vpack.c.b16 %v391, %v391
    %v394 = vpack.c.b16 %v392, %v392
    %397 = vst [vmem:[%s7] sm:$0xf] %v393
    %398 = vst [vmem:[%s7 + $0x4] sm:$0xf] %v394
    // Predicated region
    $region42: #{simple_mlp_forward.1} parent=1 // pred_check
      _
    $region43: #{simple_mlp_forward.1} parent=1 // pred_check_branch
      %400 = sbr.rel (0) target = $region45
    $region44: #{simple_mlp_forward.1} parent=1 // pred_region
      _
    $region45: #{simple_mlp_forward.1} parent=1 // pred_fallthru
      _
    // Predicated region
    $region46: #{simple_mlp_forward.1} parent=1 // pred_check
      _
    $region47: #{simple_mlp_forward.1} parent=1 // pred_check_branch
      %402 = sbr.rel (0) target = $region49
    $region48: #{simple_mlp_forward.1} parent=1 // pred_region
      _
    $region49: #{simple_mlp_forward.1} parent=1 // pred_fallthru
      _
    %403 = vsyncpa [#allocation3], 1
    %404 = vsyncpa [#allocation5], 1

</llo_original>
